<compile_context>
chip_gen: v5e
topology: v5e:2x2
jax: 0.10.0
libtpu: 0.0.40
codegen_flags: <defaults>
</compile_context>

<pallas_src>
import functools

import jax
import jax.numpy as jnp
from jax import lax
from jax.experimental import pallas as pl
from jax.experimental.pallas import tpu as pltpu


def contrastive_tsnet_kernel(x1_ref, x2_ref, x3_ref, we_ref, be_ref,
                             w1_ref, b1_ref, w2_ref, b2_ref, out_ref,
                             *, ew_dtype):
    tb = x1_ref.shape[0]

    # ---- embedder: all three views in a single MXU pass ---------------------
    # Stack + bf16 cast in-register (no separate concat/cast XLA op in the wrapper).
    x = jnp.concatenate([x1_ref[...], x2_ref[...], x3_ref[...]], axis=0)  # (3*tb, IN) f32
    z = jnp.dot(x.astype(we_ref.dtype), we_ref[...],
                preferred_element_type=jnp.float32)                       # (3*tb, E) f32
    z = jnp.maximum(z + be_ref[...], 0.0)

    # ---- |z1 - z2| and |z2 - z3| in one shot --------------------------------
    # rows [0:2tb) of z are [z1; z2], rows [tb:3tb) are [z2; z3]
    # ew_dtype is bf16 on v6e/v7x (halves vreg pressure / ld-st bytes), f32 on v5e.
    zc = z.astype(ew_dtype)
    d = jnp.abs(zc[:2 * tb, :] - zc[tb:, :])                  # (2*tb, E) = [|z1-z2|; |z2-z3|]

    # ---- classifier layer 1: single fused K=2E matmul -----------------------
    # (A split-w1 two-dot variant avoids the lane concat but is near-neutral at
    #  E=32; keep the single fused weight push.)
    u = jnp.concatenate([d[:tb, :], d[tb:, :]], axis=1)       # (tb, 2E) lane concat
    h = jnp.dot(u.astype(w1_ref.dtype), w1_ref[...],
                preferred_element_type=jnp.float32)
    # Dropout(p=0.5) is the identity in eval mode.
    # TODO(synk): training-mode dropout would use pltpu.prng_seed / prng_random_bits.
    h = jnp.maximum(h + b1_ref[...], 0.0)                     # (tb, E) f32

    # ---- classifier layer 2: (1,E) . (tb,E)^T -> lane-dense (1, tb) row ------
    # Contracting both operands on their last dim (q @ k^T pattern) lands the
    # batch along lanes, so the packed output block is an unmasked lane-dense
    # store of exactly one float per batch row (no (B,128) replicated slab).
    r = lax.dot_general(w2_ref[...], h, (((1,), (1,)), ((), ())),
                        preferred_element_type=jnp.float32)   # (1, tb) f32
    out_ref[...] = r + b2_ref[0]                              # b2: scalar from SMEM


def prepare_params(params):
    """One-time parameter preparation (the analogue of loading the checkpoint):
    cast the MXU weight operands to bf16 once, and flatten the scalar bias to a
    tiny 1-D SMEM-friendly array.  Biases stay f32 (added post-accumulation)."""
    we, be, w1, b1, w2_row, b2 = params
    return (we.astype(jnp.bfloat16), be, w1.astype(jnp.bfloat16), b1,
            w2_row, jnp.reshape(b2, (1,)))


def contrastive_tsnet_forward(x1, x2, x3, prepped_params, *, tb=None):
    """Fused forward pass.  x1/x2/x3: (B, IN_DIM) f32.  Returns (B, 1) f32."""
    we, be, w1, b1, w2_row, b2 = prepped_params
    B, in_dim = x1.shape

    # Row tile: per-grid-step overhead is ~0.35 us and VMEM is NOT the binder at
    # these feature dims (a 4096-row f32 tile of all three views, double-buffered,
    # is only ~6 MiB -- well under the 16/32 MiB scoped-VMEM default on
    # v5e/v6e/v7x), so use large tiles; raise vmem_limit_bytes via
    # pltpu.CompilerParams only if tb is pushed far beyond this.
    if tb is None:
        tb = min(B, 4096)
    if B % tb != 0:
        raise ValueError(f"batch {B} must be a multiple of the row tile {tb}")
    g = B // tb

    # bf16 elementwise only on bf16-native VPUs (v6e/v7x), and only when the
    # per-view row split (tb) keeps bf16 packed-sublane alignment (tb % 16 == 0).
    kind = jax.devices()[0].device_kind.lower()
    bf16_vpu = not any(t in kind for t in ("v2", "v3", "v4", "v5"))
    ew_dtype = jnp.bfloat16 if (bf16_vpu and tb % 16 == 0) else jnp.float32

    kernel = functools.partial(contrastive_tsnet_kernel, ew_dtype=ew_dtype)

    view_spec = pl.BlockSpec((tb, in_dim), lambda i: (i, 0))

    def resident_spec(shape):
        # Full-array block with a constant index map: DMA'd once, stays resident
        # in VMEM across all grid steps (no re-fetch).
        return pl.BlockSpec(shape, lambda i: (0,) * len(shape))

    out = pl.pallas_call(
        kernel,
        out_shape=jax.ShapeDtypeStruct((g, tb), jnp.float32),   # packed, lane-dense
        grid=(g,),
        in_specs=[
            view_spec, view_spec, view_spec,                    # x1, x2, x3 (f32)
            resident_spec(we.shape),
            resident_spec(be.shape),
            resident_spec(w1.shape),
            resident_spec(b1.shape),
            resident_spec(w2_row.shape),
            pl.BlockSpec(memory_space=pltpu.MemorySpace.SMEM),  # scalar bias b2, (1,)
        ],
        out_specs=pl.BlockSpec((1, tb), lambda i: (i, 0)),
        compiler_params=pltpu.CompilerParams(
            dimension_semantics=("parallel",)),  # batch tiles sharded across v7x's 2 TCs
    )(x1, x2, x3, we, be, w1, b1, w2_row, b2)

    # (g, tb) packed results -> (B, 1); out[i, j] is batch row i*tb + j.
    return out.reshape(B, 1)


def reference_forward(x1, x2, x3, params):
    we, be, w1, b1, w2_row, b2 = params
    emb = lambda t: jnp.maximum(t @ we + be, 0.0)
    z1, z2, z3 = emb(x1), emb(x2), emb(x3)
    u = jnp.concatenate([jnp.abs(z1 - z2), jnp.abs(z2 - z3)], axis=1)
    h = jnp.maximum(u @ w1 + b1, 0.0)
    return h @ w2_row.T + b2


if __name__ == "__main__":
    B, IN_DIM, EMB = 8, 64, 32   # small shapes: batch=8, input features=64, emb_size=32

    key = jax.random.PRNGKey(0)
    keys = jax.random.split(key, 9)

    # three input views (the list `x` of the PyTorch forward)
    x1 = jax.random.normal(keys[0], (B, IN_DIM), dtype=jnp.float32)
    x2 = jax.random.normal(keys[1], (B, IN_DIM), dtype=jnp.float32)
    x3 = jax.random.normal(keys[2], (B, IN_DIM), dtype=jnp.float32)

    # deterministic parameters (PyTorch Linear weights stored transposed: (in, out))
    we     = jax.random.normal(keys[3], (IN_DIM, EMB), dtype=jnp.float32) * 0.1
    be     = jax.random.normal(keys[4], (1, EMB), dtype=jnp.float32) * 0.1
    w1     = jax.random.normal(keys[5], (2 * EMB, EMB), dtype=jnp.float32) * 0.1  # Linear(2E, E)
    b1     = jax.random.normal(keys[6], (1, EMB), dtype=jnp.float32) * 0.1
    w2_row = jax.random.normal(keys[7], (1, EMB), dtype=jnp.float32) * 0.1        # Linear(E, 1) weight as a row
    b2     = jax.random.normal(keys[8], (1, 1), dtype=jnp.float32) * 0.1

    raw_params = (we, be, w1, b1, w2_row, b2)
    prepped = prepare_params(raw_params)   # one-time bf16 weight cast + bias flatten

    out = contrastive_tsnet_forward(x1, x2, x3, prepped)
    out = jax.block_until_ready(out)

    ref = reference_forward(x1, x2, x3, raw_params)
    assert out.shape == (B, 1)
    # bf16 MXU operands (f32 accumulation) -> looser tolerance vs the f32 reference.
    assert jnp.allclose(out, ref, atol=5e-2, rtol=5e-2), "Pallas output mismatch vs reference"

    print("KERNEL_OK")
</pallas_src>

<mosaic_0001>
module attributes {stable_mosaic.version = 11 : i64} {
  func.func @contrastive_tsnet_kernel(%arg0: i32, %arg1: memref<8x64xf32, #tpu.memory_space<vmem>>, %arg2: memref<8x64xf32, #tpu.memory_space<vmem>>, %arg3: memref<8x64xf32, #tpu.memory_space<vmem>>, %arg4: memref<64x32xbf16, #tpu.memory_space<vmem>>, %arg5: memref<1x32xf32, #tpu.memory_space<vmem>>, %arg6: memref<64x32xbf16, #tpu.memory_space<vmem>>, %arg7: memref<1x32xf32, #tpu.memory_space<vmem>>, %arg8: memref<1x32xf32, #tpu.memory_space<vmem>>, %arg9: memref<1xf32, #tpu.memory_space<smem>>, %arg10: memref<1x8xf32, #tpu.memory_space<vmem>>) attributes {dimension_semantics = [#tpu.dimension_semantics<parallel>], iteration_bounds = array<i64: 1>, scalar_prefetch = 0 : i64, scratch_operands = 0 : i64, tpu.core_type = #tpu.core_type<tc>, window_params = [{transform_indices = @transform_0, window_bounds = array<i64: 8, 64>}, {transform_indices = @transform_1, window_bounds = array<i64: 8, 64>}, {transform_indices = @transform_2, window_bounds = array<i64: 8, 64>}, {pipeline_mode = #tpu.pipeline_mode<synchronous>, transform_indices = @transform_3, window_bounds = array<i64: 64, 32>}, {pipeline_mode = #tpu.pipeline_mode<synchronous>, transform_indices = @transform_4, window_bounds = array<i64: 1, 32>}, {pipeline_mode = #tpu.pipeline_mode<synchronous>, transform_indices = @transform_5, window_bounds = array<i64: 64, 32>}, {pipeline_mode = #tpu.pipeline_mode<synchronous>, transform_indices = @transform_6, window_bounds = array<i64: 1, 32>}, {pipeline_mode = #tpu.pipeline_mode<synchronous>, transform_indices = @transform_7, window_bounds = array<i64: 1, 32>}, {transform_indices = @transform_8, window_bounds = array<i64: 1>}, {transform_indices = @transform_9, window_bounds = array<i64: 1, 8>}]} {
    %c0 = arith.constant 0 : index
    %c0_0 = arith.constant 0 : index
    %0 = vector.load %arg1[%c0, %c0_0] : memref<8x64xf32, #tpu.memory_space<vmem>>, vector<8x64xf32>
    %c0_1 = arith.constant 0 : index
    %c0_2 = arith.constant 0 : index
    %1 = vector.load %arg2[%c0_1, %c0_2] : memref<8x64xf32, #tpu.memory_space<vmem>>, vector<8x64xf32>
    %c0_3 = arith.constant 0 : index
    %c0_4 = arith.constant 0 : index
    %2 = vector.load %arg3[%c0_3, %c0_4] : memref<8x64xf32, #tpu.memory_space<vmem>>, vector<8x64xf32>
    %3 = tpu.concatenate %0, %1, %2 in 0 : vector<8x64xf32>, vector<8x64xf32>, vector<8x64xf32> -> vector<24x64xf32>
    %4 = arith.truncf %3 : vector<24x64xf32> to vector<24x64xbf16>
    %c0_5 = arith.constant 0 : index
    %c0_6 = arith.constant 0 : index
    %5 = vector.load %arg4[%c0_5, %c0_6] : memref<64x32xbf16, #tpu.memory_space<vmem>>, vector<64x32xbf16>
    %cst = arith.constant dense<0.000000e+00> : vector<24x32xf32>
    %6 = tpu.matmul %4, %5, %cst {dimension_numbers = #tpu.dot_dimension_numbers<[1], [0], [0], [1], [0, 0, 1, 1], [], []>} : vector<24x64xbf16>, vector<64x32xbf16>, vector<24x32xf32> -> vector<24x32xf32>
    %c0_7 = arith.constant 0 : index
    %c0_8 = arith.constant 0 : index
    %7 = vector.load %arg5[%c0_7, %c0_8] : memref<1x32xf32, #tpu.memory_space<vmem>>, vector<1x32xf32>
    %8 = vector.broadcast %7 : vector<1x32xf32> to vector<24x32xf32>
    %9 = arith.addf %6, %8 : vector<24x32xf32>
    %cst_9 = arith.constant 0.000000e+00 : f32
    %10 = vector.broadcast %cst_9 : f32 to vector<24x32xf32>
    %11 = arith.maximumf %9, %10 : vector<24x32xf32>
    %12 = vector.extract_strided_slice %11 {offsets = [0, 0], sizes = [16, 32], strides = [1, 1]} : vector<24x32xf32> to vector<16x32xf32>
    %13 = vector.extract_strided_slice %11 {offsets = [8, 0], sizes = [16, 32], strides = [1, 1]} : vector<24x32xf32> to vector<16x32xf32>
    %14 = arith.subf %12, %13 : vector<16x32xf32>
    %15 = math.absf %14 : vector<16x32xf32>
    %16 = vector.extract_strided_slice %15 {offsets = [0, 0], sizes = [8, 32], strides = [1, 1]} : vector<16x32xf32> to vector<8x32xf32>
    %17 = vector.extract_strided_slice %15 {offsets = [8, 0], sizes = [8, 32], strides = [1, 1]} : vector<16x32xf32> to vector<8x32xf32>
    %18 = tpu.concatenate %16, %17 in 1 : vector<8x32xf32>, vector<8x32xf32> -> vector<8x64xf32>
    %19 = arith.truncf %18 : vector<8x64xf32> to vector<8x64xbf16>
    %c0_10 = arith.constant 0 : index
    %c0_11 = arith.constant 0 : index
    %20 = vector.load %arg6[%c0_10, %c0_11] : memref<64x32xbf16, #tpu.memory_space<vmem>>, vector<64x32xbf16>
    %cst_12 = arith.constant dense<0.000000e+00> : vector<8x32xf32>
    %21 = tpu.matmul %19, %20, %cst_12 {dimension_numbers = #tpu.dot_dimension_numbers<[1], [0], [0], [1], [0, 0, 1, 1], [], []>} : vector<8x64xbf16>, vector<64x32xbf16>, vector<8x32xf32> -> vector<8x32xf32>
    %c0_13 = arith.constant 0 : index
    %c0_14 = arith.constant 0 : index
    %22 = vector.load %arg7[%c0_13, %c0_14] : memref<1x32xf32, #tpu.memory_space<vmem>>, vector<1x32xf32>
    %23 = vector.broadcast %22 : vector<1x32xf32> to vector<8x32xf32>
    %24 = arith.addf %21, %23 : vector<8x32xf32>
    %cst_15 = arith.constant 0.000000e+00 : f32
    %25 = vector.broadcast %cst_15 : f32 to vector<8x32xf32>
    %26 = arith.maximumf %24, %25 : vector<8x32xf32>
    %c0_16 = arith.constant 0 : index
    %c0_17 = arith.constant 0 : index
    %27 = vector.load %arg8[%c0_16, %c0_17] : memref<1x32xf32, #tpu.memory_space<vmem>>, vector<1x32xf32>
    %cst_18 = arith.constant dense<0.000000e+00> : vector<1x8xf32>
    %28 = tpu.matmul %27, %26, %cst_18 {dimension_numbers = #tpu.dot_dimension_numbers<[1], [1], [0], [0], [0, 0, 1, 0], [], []>} : vector<1x32xf32>, vector<8x32xf32>, vector<1x8xf32> -> vector<1x8xf32>
    %c0_19 = arith.constant 0 : index
    %29 = memref.load %arg9[%c0_19] : memref<1xf32, #tpu.memory_space<smem>>
    %30 = vector.broadcast %29 : f32 to vector<1x8xf32>
    %31 = arith.addf %28, %30 : vector<1x8xf32>
    %c0_20 = arith.constant 0 : index
    %c0_21 = arith.constant 0 : index
    %32 = vector.load %arg10[%c0_20, %c0_21] : memref<1x8xf32, #tpu.memory_space<vmem>>, vector<1x8xf32>
    tpu.vector_store %arg10[%c0_20, %c0_21], %31 {strides = array<i32>} : memref<1x8xf32, #tpu.memory_space<vmem>>, vector<1x8xf32>,
    return
  }
  func.func @transform_0(%arg0: i32) -> (i32, i32) {
    %c0_i32 = arith.constant 0 : i32
    %c0_i32_0 = arith.constant 0 : i32
    return %arg0, %c0_i32 : i32, i32
  }
  func.func @transform_1(%arg0: i32) -> (i32, i32) {
    %c0_i32 = arith.constant 0 : i32
    %c0_i32_0 = arith.constant 0 : i32
    return %arg0, %c0_i32 : i32, i32
  }
  func.func @transform_2(%arg0: i32) -> (i32, i32) {
    %c0_i32 = arith.constant 0 : i32
    %c0_i32_0 = arith.constant 0 : i32
    return %arg0, %c0_i32 : i32, i32
  }
  func.func @transform_3(%arg0: i32) -> (i32, i32) {
    %c0_i32 = arith.constant 0 : i32
    %c0_i32_0 = arith.constant 0 : i32
    %c0_i32_1 = arith.constant 0 : i32
    return %c0_i32, %c0_i32_0 : i32, i32
  }
  func.func @transform_4(%arg0: i32) -> (i32, i32) {
    %c0_i32 = arith.constant 0 : i32
    %c0_i32_0 = arith.constant 0 : i32
    %c0_i32_1 = arith.constant 0 : i32
    return %c0_i32, %c0_i32_0 : i32, i32
  }
  func.func @transform_5(%arg0: i32) -> (i32, i32) {
    %c0_i32 = arith.constant 0 : i32
    %c0_i32_0 = arith.constant 0 : i32
    %c0_i32_1 = arith.constant 0 : i32
    return %c0_i32, %c0_i32_0 : i32, i32
  }
  func.func @transform_6(%arg0: i32) -> (i32, i32) {
    %c0_i32 = arith.constant 0 : i32
    %c0_i32_0 = arith.constant 0 : i32
    %c0_i32_1 = arith.constant 0 : i32
    return %c0_i32, %c0_i32_0 : i32, i32
  }
  func.func @transform_7(%arg0: i32) -> (i32, i32) {
    %c0_i32 = arith.constant 0 : i32
    %c0_i32_0 = arith.constant 0 : i32
    %c0_i32_1 = arith.constant 0 : i32
    return %c0_i32, %c0_i32_0 : i32, i32
  }
  func.func @transform_8(%arg0: i32) -> i32 {
    %c0_i32 = arith.constant 0 : i32
    %c0_i32_0 = arith.constant 0 : i32
    return %c0_i32 : i32
  }
  func.func @transform_9(%arg0: i32) -> (i32, i32) {
    %c0_i32 = arith.constant 0 : i32
    %c0_i32_0 = arith.constant 0 : i32
    return %arg0, %c0_i32 : i32, i32
  }
}

</mosaic_0001>

<llo_original>
// kernel: tpu_custom_call.1
$region0: #{tpu_custom_call.1}
  #allocation0 [shape = 'u32[]', space=smem, size = 0x4, offset = 0x4, fixed_abs, tag = 'smem constant byte address 0x4 - core index']
  #allocation1 [shape = 'u32[72,128]{1,0:T(1,128)}', space=vmem, size = 0x9000, scoped, tag = 'internal scratch']
  #allocation2 [shape = 'f32[1]{0:T(128)S(6)}', space=smem, size = 0x200, scoped, tag = 'scoped memory for tpu_custom_call.1']
  %s0 = inlined_call_operand.vmem [shape: f32[8,64], index: 0, kind: input, shape index: {}]
  %s1 = inlined_call_operand.vmem [shape: f32[8,64], index: 1, kind: input, shape index: {}]
  %s2 = inlined_call_operand.vmem [shape: f32[8,64], index: 2, kind: input, shape index: {}]
  %s3 = inlined_call_operand.vmem [shape: bf16[64,32], index: 3, kind: input, shape index: {}]
  %s4 = inlined_call_operand.vmem [shape: f32[1,32], index: 4, kind: input, shape index: {}]
  %s5 = inlined_call_operand.vmem [shape: bf16[64,32], index: 5, kind: input, shape index: {}]
  %s6 = inlined_call_operand.vmem [shape: f32[1,32], index: 6, kind: input, shape index: {}]
  %s7 = inlined_call_operand.vmem [shape: f32[1,32], index: 7, kind: input, shape index: {}]
  %s8 = inlined_call_operand.<no memory space> [shape: f32[1], index: 8, kind: input, shape index: {}]
  %s9 = inlined_call_operand.hbm [shape: f32[1,8], index: 9, kind: output, shape index: {}]
  %s10 = sld [smem:[#allocation0]]
  $region46: #{tpu_custom_call.1} parent=0
    _
  %s12 = ssub.s32 1, %s10
  %s13 = scalar_select 0, %s12, %s10
  %14 = sst [smem:[#allocation2]] %s8
  $region1: #{tpu_custom_call.1} parent=0
    #allocation3 [shape = 'u8[512]{0}', space=vmem, size = 0x400, scoped, tag = 'output window, operand 0, single buffered']
    #allocation4 [shape = 's32[1]{0}', space=sflag, size = 0x4, scoped, tag = 'scoped memory for tpu_custom_call.1']
    %15 = vsyncpa [#allocation4], 0
    // Predicated region
    $region2: #{tpu_custom_call.1} parent=1 // pred_check
      _
    $region3: #{tpu_custom_call.1} parent=1 // pred_check_branch
      %17 = sbr.rel (0) target = $region5
    $region4: #{tpu_custom_call.1} parent=1 // pred_region
      _
    $region5: #{tpu_custom_call.1} parent=1 // pred_fallthru
      _
    // Predicated region
    $region6: #{tpu_custom_call.1} parent=1 // pred_check
      _
    $region7: #{tpu_custom_call.1} parent=1 // pred_check_branch
      %19 = sbr.rel (0) target = $region9
    $region8: #{tpu_custom_call.1} parent=1 // pred_region
      _
    $region9: #{tpu_custom_call.1} parent=1 // pred_fallthru
      _
    // Predicated region
    $region10: #{tpu_custom_call.1} parent=1 // pred_check
      _
    $region11: #{tpu_custom_call.1} parent=1 // pred_check_branch
      %21 = sbr.rel (0) target = $region13
    $region12: #{tpu_custom_call.1} parent=1 // pred_region
      _
    $region13: #{tpu_custom_call.1} parent=1 // pred_fallthru
      _
    // Predicated region
    $region14: #{tpu_custom_call.1} parent=1 // pred_check
      _
    $region15: #{tpu_custom_call.1} parent=1 // pred_check_branch
      %23 = sbr.rel (0) target = $region17
    $region16: #{tpu_custom_call.1} parent=1 // pred_region
      _
    $region17: #{tpu_custom_call.1} parent=1 // pred_fallthru
      _
    // Predicated region
    $region18: #{tpu_custom_call.1} parent=1 // pred_check
      _
    $region19: #{tpu_custom_call.1} parent=1 // pred_check_branch
      %25 = sbr.rel (0) target = $region21
    $region20: #{tpu_custom_call.1} parent=1 // pred_region
      _
    $region21: #{tpu_custom_call.1} parent=1 // pred_fallthru
      _
    // Predicated region
    $region22: #{tpu_custom_call.1} parent=1 // pred_check
      _
    $region23: #{tpu_custom_call.1} parent=1 // pred_check_branch
      %27 = sbr.rel (0) target = $region25
    $region24: #{tpu_custom_call.1} parent=1 // pred_region
      _
    $region25: #{tpu_custom_call.1} parent=1 // pred_fallthru
      _
    // Predicated region
    $region26: #{tpu_custom_call.1} parent=1 // pred_check
      _
    $region27: #{tpu_custom_call.1} parent=1 // pred_check_branch
      %29 = sbr.rel (0) target = $region29
    $region28: #{tpu_custom_call.1} parent=1 // pred_region
      _
    $region29: #{tpu_custom_call.1} parent=1 // pred_fallthru
      _
    // Predicated region
    $region30: #{tpu_custom_call.1} parent=1 // pred_check
      _
    $region31: #{tpu_custom_call.1} parent=1 // pred_check_branch
      %31 = sbr.rel (0) target = $region33
    $region32: #{tpu_custom_call.1} parent=1 // pred_region
      _
    $region33: #{tpu_custom_call.1} parent=1 // pred_fallthru
      _
    // Predicated region
    $region34: #{tpu_custom_call.1} parent=1 // pred_check
      _
    $region35: #{tpu_custom_call.1} parent=1 // pred_check_branch
      %33 = sbr.rel (0) target = $region37
    $region36: #{tpu_custom_call.1} parent=1 // pred_region
      _
    $region37: #{tpu_custom_call.1} parent=1 // pred_fallthru
      _
    %v35 = vld [vmem:[%s0] sm:$0xff]
    %v36 = vld [vmem:[%s1] sm:$0xff]
    %v37 = vld [vmem:[%s2] sm:$0xff]
    %v38 = vpack.c.bf16 %v36, %v35
    %v39 = vpack.c.bf16 %v37, %v37
    %v40 = vld [vmem:[%s3] sm:$0xf]
    %v41 = vld [vmem:[%s3 + $0x4] sm:$0xf]
    %v42 = vld [vmem:[%s3 + $0x8] sm:$0xf]
    %v43 = vld [vmem:[%s3 + $0xc] sm:$0xf]
    %v44 = vld [vmem:[%s3 + $0x10] sm:$0xf]
    %v45 = vld [vmem:[%s3 + $0x14] sm:$0xf]
    %v46 = vld [vmem:[%s3 + $0x18] sm:$0xf]
    %v47 = vld [vmem:[%s3 + $0x1c] sm:$0xf]
    %v48 = vld [vmem:[%s4] sm:$0x1]
    %v50 = vperm.slane %v48, 0
    %v60 = vunpack.c.l.b16 %v40
    %v61 = vunpack.c.l.b16 %v41
    %v62 = vunpack.c.l.b16 %v42
    %v63 = vunpack.c.l.b16 %v43
    %v64 = vunpack.c.l.b16 %v44
    %v65 = vunpack.c.l.b16 %v45
    %v66 = vunpack.c.l.b16 %v46
    %v67 = vunpack.c.l.b16 %v47
    %v68 = vpack.c.b16 %v61, %v60
    %v69 = vpack.c.b16 %v63, %v62
    %v70 = vpack.c.b16 %v65, %v64
    %v71 = vpack.c.b16 %v67, %v66
    %vm76 = vcmask 523264
    %v78 = vsel %vm76, %v38, 0
    %v81 = vsel %vm76, %v39, 0
    %83 = vmatpush.bf16.msra.mxu0 0
    %84 = vmatpush.bf16.msra.mxu0 0
    %85 = vmatpush.bf16.msra.mxu0 0
    %86 = vmatpush.bf16.msra.mxu0 0
    %87 = vmatpush.bf16.msra.mxu0 %v71
    %88 = vmatpush.bf16.msra.mxu0 %v70
    %89 = vmatpush.bf16.msra.mxu0 %v69
    %90 = vmatpush.bf16.msra.mxu0 %v68
    %91 = vmatmul.bf16.gmra.mxu0 %v78
    %v92 = vpop.f32.mrf.mxu0
    %v93 = vadd.f32 %v50, %v92
    %v94 = vpop.f32.mrf.mxu0
    %v95 = vadd.f32 %v50, %v94
    %96 = vmatmul.bf16.gmra.mxu0 %v81
    %v97 = vpop.f32.mrf.mxu0
    %v98 = vadd.f32 %v50, %v97
    %v99 = vpop.f32.mrf.mxu0
    %100 = vdwg.mxu0
    %v101 = vmax.f32 %v93, 0.0
    %v102 = vmax.f32 %v95, 0.0
    %v103 = vmax.f32 %v98, 0.0
    %v104 = vsub.f32 %v101, %v102
    %v105 = vsub.f32 %v102, %v103
    %v106 = vand.u32 2147483647, %v104
    %v107 = vand.u32 2147483647, %v105
    %109 = vrot.lane.b32.xlu0 %v107, 32
    %v110 = vpop.permute.xlu0 %109
    %vm112 = vcmask 261120
    %v113 = vsel %vm112, %v106, %v110
    %v114 = vpack.c.bf16 %v113, %v113
    %v115 = vld [vmem:[%s5] sm:$0xf]
    %v116 = vld [vmem:[%s5 + $0x4] sm:$0xf]
    %v117 = vld [vmem:[%s5 + $0x8] sm:$0xf]
    %v118 = vld [vmem:[%s5 + $0xc] sm:$0xf]
    %v119 = vld [vmem:[%s5 + $0x10] sm:$0xf]
    %v120 = vld [vmem:[%s5 + $0x14] sm:$0xf]
    %v121 = vld [vmem:[%s5 + $0x18] sm:$0xf]
    %v122 = vld [vmem:[%s5 + $0x1c] sm:$0xf]
    %v123 = vld [vmem:[%s6] sm:$0x1]
    %v125 = vperm.slane %v123, 0
    %v135 = vunpack.c.l.b16 %v115
    %v136 = vunpack.c.l.b16 %v116
    %v137 = vunpack.c.l.b16 %v117
    %v138 = vunpack.c.l.b16 %v118
    %v139 = vunpack.c.l.b16 %v119
    %v140 = vunpack.c.l.b16 %v120
    %v141 = vunpack.c.l.b16 %v121
    %v142 = vunpack.c.l.b16 %v122
    %v143 = vpack.c.b16 %v136, %v135
    %v144 = vpack.c.b16 %v138, %v137
    %v145 = vpack.c.b16 %v140, %v139
    %v146 = vpack.c.b16 %v142, %v141
    %v152 = vsel %vm76, %v114, 0
    %154 = vmatpush.bf16.msra.mxu0 0
    %155 = vmatpush.bf16.msra.mxu0 0
    %156 = vmatpush.bf16.msra.mxu0 0
    %157 = vmatpush.bf16.msra.mxu0 0
    %158 = vmatpush.bf16.msra.mxu0 %v146
    %159 = vmatpush.bf16.msra.mxu0 %v145
    %160 = vmatpush.bf16.msra.mxu0 %v144
    %161 = vmatpush.bf16.msra.mxu0 %v143
    %162 = vmatmul.bf16.gmra.mxu0 %v152
    %v163 = vpop.f32.mrf.mxu0
    %v164 = vadd.f32 %v125, %v163
    %v165 = vpop.f32.mrf.mxu0
    %166 = vdwg.mxu0
    %v167 = vmax.f32 %v164, 0.0
    %v168 = vld [vmem:[%s7] sm:$0x1]
    %s169 = sld [smem:[#allocation2]]
    %v170 = vstv %s169
    %v172 = vsel %vm112, %v168, 0
    %v175 = vsel %vm112, %v167, 0
    %177 = vmatpush.xpose.msra.mxu0 0.0
    %178 = vmatpush.xpose.msra.mxu0 0.0
    %179 = vmatpush.xpose.msra.mxu0 0.0
    %180 = vmatpush.xpose.msra.mxu0 0.0
    %181 = vmatpush.xpose.msra.mxu0 0.0
    %182 = vmatpush.xpose.msra.mxu0 0.0
    %183 = vmatpush.xpose.msra.mxu0 0.0
    %184 = vmatpush.xpose.msra.mxu0 0.0
    %185 = vmatpush.xpose.msra.mxu0 0.0
    %186 = vmatpush.xpose.msra.mxu0 0.0
    %187 = vmatpush.xpose.msra.mxu0 0.0
    %188 = vmatpush.xpose.msra.mxu0 0.0
    %189 = vmatpush.xpose.msra.mxu0 0.0
    %190 = vmatpush.xpose.msra.mxu0 0.0
    %191 = vmatpush.xpose.msra.mxu0 0.0
    %192 = vmatpush.xpose.msra.mxu0 %v175
    %193 = vmatmul.f32.gmra.mxu0 %v172
    %v194 = vpop.f32.mrf.mxu0
    %v195 = vadd.f32 %v170, %v194
    %196 = vdwg.mxu0
    %vm197 = vcmask 57344
    %198 = vst.msk [vmem:[#allocation3] sm:$0x1] %vm197, %v195
    // Predicated region
    $region38: #{tpu_custom_call.1} parent=1 // pred_check
      _
    $region39: #{tpu_custom_call.1} parent=1 // pred_check_branch
      %200 = sbr.rel (0) target = $region41
    $region40: #{tpu_custom_call.1} parent=1 // pred_region
      %202 = vsyncadd [#allocation4], 0
      %s204 = sshll.u32 [#allocation3], 4
      %s205 = int_to_ptr.vmem [resolvable:$true] %s204
      %s206 = sshll.u32 %s9, 4
      %s207 = int_to_ptr.hbm [resolvable:$true] %s206
      %209 = dma.vmem_to_hbm [thread:$0]  %s205, 16, %s207, [#allocation4]
    $region41: #{tpu_custom_call.1} parent=1 // pred_fallthru
      _
    // Predicated region
    $region42: #{tpu_custom_call.1} parent=1 // pred_check
      _
    $region43: #{tpu_custom_call.1} parent=1 // pred_check_branch
      %211 = sbr.rel (0) target = $region45
    $region44: #{tpu_custom_call.1} parent=1 // pred_region
      %213 = dma.done [#allocation4], 16
    $region45: #{tpu_custom_call.1} parent=1 // pred_fallthru
      _
    %214 = vsyncpa [#allocation4], 1

</llo_original>
